<compile_context>
chip_gen: v5e
topology: v5e:2x2
jax: 0.10.0
libtpu: 0.0.40
codegen_flags: <defaults>
</compile_context>

<pallas_src>
import math

import jax
import jax.numpy as jnp
from jax.experimental import pallas as pl
from jax.experimental.pallas import tpu as pltpu

LANE = 128           # TPU lane width; feature dims padded to multiples of this
HIDDEN = 64          # logical hidden size from the PyTorch module
HIDDEN_PAD = 128     # 64 -> 128: lane-dense matmul N/K dims and stores
SUBLANE_BF16 = 16    # bf16 sublane granule; batch pads to this, not to 128


def qnet_kernel(x_ref, w1_ref, b1_ref, w2_ref, b2_ref, w3_ref, b3_ref, o_ref):
    # fc1 + relu  (bf16 operands on the MXU, f32 accumulation)
    x = x_ref[...]
    h1 = jnp.dot(x, w1_ref[...], preferred_element_type=jnp.float32) + b1_ref[...]
    h1 = jnp.maximum(h1, 0.0).astype(jnp.bfloat16)
    # fc2 + relu
    h2 = jnp.dot(h1, w2_ref[...], preferred_element_type=jnp.float32) + b2_ref[...]
    h2 = jnp.maximum(h2, 0.0).astype(jnp.bfloat16)
    # fc3 (no activation); lane-dense (tb, 128) store, bf16 writeback
    o_ref[...] = (
        jnp.dot(h2, w3_ref[...], preferred_element_type=jnp.float32) + b3_ref[...]
    ).astype(o_ref.dtype)


def _round_up(n, m):
    return (n + m - 1) // m * m


def _pad2d(a, rows, cols):
    return jnp.pad(a, ((0, rows - a.shape[0]), (0, cols - a.shape[1])))


def _num_tensorcores():
    """2 on v7x (two TensorCores per chip), 1 on v5e/v6e. Safe fallback: 1."""
    try:
        return max(1, int(getattr(jax.devices()[0], "num_cores", 1)))
    except Exception:
        return 1


def init_linear(key, in_features, out_features):
    """PyTorch nn.Linear-style init (uniform +/- 1/sqrt(fan_in)).
    Weight returned as [in, out] (transposed vs torch), bias as [out]."""
    kw, kb = jax.random.split(key)
    bound = 1.0 / math.sqrt(in_features)
    w = jax.random.uniform(kw, (in_features, out_features), jnp.float32, -bound, bound)
    b = jax.random.uniform(kb, (out_features,), jnp.float32, -bound, bound)
    return w, b


def prepare_params(params, state_size, action_size):
    """Zero-pad feature dims to the 128-lane width; cast weights to bf16 once
    (done outside the per-step call so it isn't repeated)."""
    w1, b1 = params["fc1"]
    w2, b2 = params["fc2"]
    w3, b3 = params["fc3"]
    out_pad = _round_up(action_size, LANE)

    w1p = _pad2d(w1, state_size, HIDDEN_PAD).astype(jnp.bfloat16)
    w2p = _pad2d(w2, HIDDEN_PAD, HIDDEN_PAD).astype(jnp.bfloat16)
    w3p = _pad2d(w3, HIDDEN_PAD, out_pad).astype(jnp.bfloat16)
    # Biases stay f32 (exact add); padded entries are 0 so relu(0)=0 and padded
    # output columns carry no contribution.
    b1p = jnp.pad(b1, (0, HIDDEN_PAD - b1.shape[0])).reshape(1, HIDDEN_PAD).astype(jnp.float32)
    b2p = jnp.pad(b2, (0, HIDDEN_PAD - b2.shape[0])).reshape(1, HIDDEN_PAD).astype(jnp.float32)
    b3p = jnp.pad(b3, (0, out_pad - b3.shape[0])).reshape(1, out_pad).astype(jnp.float32)
    return (w1p, b1p, w2p, b2p, w3p, b3p)


def qnetwork_forward(state, padded_params, action_size, *, num_tiles=None):
    """state: [B, state_size] f32; padded_params from prepare_params.
    Returns [B, action_size] f32 Q-values."""
    w1p, b1p, w2p, b2p, w3p, b3p = padded_params
    B, S = state.shape
    out_pad = w3p.shape[1]

    # One tile covering the whole batch on v5e/v6e (grid=(1,)); two tiles on
    # v7x so each TensorCore gets one. Batch pads only to the bf16 sublane
    # granule (16), so the pad is usually a no-op.
    if num_tiles is None:
        num_tiles = min(_num_tensorcores(), 2)
    tb = _round_up(pl.cdiv(max(B, 1), num_tiles), SUBLANE_BF16)
    b_pad = tb * num_tiles

    x = state.astype(jnp.bfloat16)
    if b_pad != B:
        x = jnp.pad(x, ((0, b_pad - B), (0, 0)))

    grid = (num_tiles,)
    # Weights/biases: constant block index -> fetched once, VMEM-resident
    # across all batch tiles. VMEM footprint: ~68 KB weights + ~1.1 KB per
    # batch row (double-buffered input + output), far under the scoped limit
    # on every generation (incl. v7x's 64 MiB physical VMEM), so no
    # vmem_limit_bytes override is needed.
    resident = lambda shape: pl.BlockSpec(shape, lambda i: (0, 0))

    flops = 2 * b_pad * (S * HIDDEN_PAD + HIDDEN_PAD * HIDDEN_PAD + HIDDEN_PAD * out_pad)
    bytes_accessed = (
        x.size * x.dtype.itemsize
        + sum(a.size * a.dtype.itemsize for a in padded_params)
        + b_pad * out_pad * 2  # bf16 output writeback
    )

    out = pl.pallas_call(
        qnet_kernel,
        out_shape=jax.ShapeDtypeStruct((b_pad, out_pad), jnp.bfloat16),
        grid=grid,
        in_specs=[
            pl.BlockSpec((tb, S), lambda i: (i, 0)),     # state tile(s)
            resident(w1p.shape), resident(b1p.shape),
            resident(w2p.shape), resident(b2p.shape),
            resident(w3p.shape), resident(b3p.shape),
        ],
        out_specs=pl.BlockSpec((tb, out_pad), lambda i: (i, 0)),
        compiler_params=pltpu.CompilerParams(
            dimension_semantics=("parallel",),  # on v7x: one tile per TensorCore
        ),
        cost_estimate=pl.CostEstimate(
            flops=flops, transcendentals=0, bytes_accessed=bytes_accessed
        ),
    )(x, w1p, b1p, w2p, b2p, w3p, b3p)

    # Drop batch padding and zero-padded action columns; cast back to f32 for
    # downstream TD-target math (tiny [B, action_size] copy).
    return out[:B, :action_size].astype(jnp.float32)


def reference_forward(state, params):
    """Pure-JAX reference mirroring the kernel's bf16-operand / f32-accumulate numerics."""
    w1, b1 = params["fc1"]
    w2, b2 = params["fc2"]
    w3, b3 = params["fc3"]
    x = state.astype(jnp.bfloat16)
    h = jnp.maximum(
        jnp.dot(x, w1.astype(jnp.bfloat16), preferred_element_type=jnp.float32) + b1, 0.0
    ).astype(jnp.bfloat16)
    h = jnp.maximum(
        jnp.dot(h, w2.astype(jnp.bfloat16), preferred_element_type=jnp.float32) + b2, 0.0
    ).astype(jnp.bfloat16)
    return jnp.dot(h, w3.astype(jnp.bfloat16), preferred_element_type=jnp.float32) + b3


if __name__ == "__main__":
    key = jax.random.PRNGKey(0)
    k_in, k1, k2, k3 = jax.random.split(key, 4)

    batch = 32           # small RL minibatch; multiple of 16 -> wrapper pad is a no-op
    state_size = 16
    action_size = 8

    state = jax.random.normal(k_in, (batch, state_size), jnp.float32)
    params = {
        "fc1": init_linear(k1, state_size, HIDDEN),
        "fc2": init_linear(k2, HIDDEN, HIDDEN),
        "fc3": init_linear(k3, HIDDEN, action_size),
    }
    padded = prepare_params(params, state_size, action_size)

    out = qnetwork_forward(state, padded, action_size)
    out = jax.block_until_ready(out)

    ref = reference_forward(state, params)
    assert out.shape == (batch, action_size)
    # Kernel writes back bf16 (and uses bf16 MXU operands), so compare at
    # bf16-level tolerance against the f32-accumulated reference.
    err = float(jnp.max(jnp.abs(out - ref)))
    assert jnp.allclose(out, ref, atol=2e-2, rtol=2e-2), f"max abs err = {err}"

    print("KERNEL_OK")
</pallas_src>

<mosaic_0001>
module attributes {stable_mosaic.version = 11 : i64} {
  func.func @qnet_kernel(%arg0: i32, %arg1: memref<32x16xbf16, #tpu.memory_space<vmem>>, %arg2: memref<16x128xbf16, #tpu.memory_space<vmem>>, %arg3: memref<1x128xf32, #tpu.memory_space<vmem>>, %arg4: memref<128x128xbf16, #tpu.memory_space<vmem>>, %arg5: memref<1x128xf32, #tpu.memory_space<vmem>>, %arg6: memref<128x128xbf16, #tpu.memory_space<vmem>>, %arg7: memref<1x128xf32, #tpu.memory_space<vmem>>, %arg8: memref<32x128xbf16, #tpu.memory_space<vmem>>) attributes {dimension_semantics = [#tpu.dimension_semantics<parallel>], iteration_bounds = array<i64: 1>, scalar_prefetch = 0 : i64, scratch_operands = 0 : i64, tpu.core_type = #tpu.core_type<tc>, window_params = [{transform_indices = @transform_0, window_bounds = array<i64: 32, 16>}, {pipeline_mode = #tpu.pipeline_mode<synchronous>, transform_indices = @transform_1, window_bounds = array<i64: 16, 128>}, {pipeline_mode = #tpu.pipeline_mode<synchronous>, transform_indices = @transform_2, window_bounds = array<i64: 1, 128>}, {pipeline_mode = #tpu.pipeline_mode<synchronous>, transform_indices = @transform_3, window_bounds = array<i64: 128, 128>}, {pipeline_mode = #tpu.pipeline_mode<synchronous>, transform_indices = @transform_4, window_bounds = array<i64: 1, 128>}, {pipeline_mode = #tpu.pipeline_mode<synchronous>, transform_indices = @transform_5, window_bounds = array<i64: 128, 128>}, {pipeline_mode = #tpu.pipeline_mode<synchronous>, transform_indices = @transform_6, window_bounds = array<i64: 1, 128>}, {transform_indices = @transform_7, window_bounds = array<i64: 32, 128>}]} {
    %c0 = arith.constant 0 : index
    %c0_0 = arith.constant 0 : index
    %0 = vector.load %arg1[%c0, %c0_0] : memref<32x16xbf16, #tpu.memory_space<vmem>>, vector<32x16xbf16>
    %c0_1 = arith.constant 0 : index
    %c0_2 = arith.constant 0 : index
    %1 = vector.load %arg2[%c0_1, %c0_2] : memref<16x128xbf16, #tpu.memory_space<vmem>>, vector<16x128xbf16>
    %cst = arith.constant dense<0.000000e+00> : vector<32x128xf32>
    %2 = tpu.matmul %0, %1, %cst {dimension_numbers = #tpu.dot_dimension_numbers<[1], [0], [0], [1], [0, 0, 1, 1], [], []>} : vector<32x16xbf16>, vector<16x128xbf16>, vector<32x128xf32> -> vector<32x128xf32>
    %c0_3 = arith.constant 0 : index
    %c0_4 = arith.constant 0 : index
    %3 = vector.load %arg3[%c0_3, %c0_4] : memref<1x128xf32, #tpu.memory_space<vmem>>, vector<1x128xf32>
    %4 = vector.broadcast %3 : vector<1x128xf32> to vector<32x128xf32>
    %5 = arith.addf %2, %4 : vector<32x128xf32>
    %cst_5 = arith.constant 0.000000e+00 : f32
    %6 = vector.broadcast %cst_5 : f32 to vector<32x128xf32>
    %7 = arith.maximumf %5, %6 : vector<32x128xf32>
    %8 = arith.truncf %7 : vector<32x128xf32> to vector<32x128xbf16>
    %c0_6 = arith.constant 0 : index
    %c0_7 = arith.constant 0 : index
    %9 = vector.load %arg4[%c0_6, %c0_7] : memref<128x128xbf16, #tpu.memory_space<vmem>>, vector<128x128xbf16>
    %cst_8 = arith.constant dense<0.000000e+00> : vector<32x128xf32>
    %10 = tpu.matmul %8, %9, %cst_8 {dimension_numbers = #tpu.dot_dimension_numbers<[1], [0], [0], [1], [0, 0, 1, 1], [], []>} : vector<32x128xbf16>, vector<128x128xbf16>, vector<32x128xf32> -> vector<32x128xf32>
    %c0_9 = arith.constant 0 : index
    %c0_10 = arith.constant 0 : index
    %11 = vector.load %arg5[%c0_9, %c0_10] : memref<1x128xf32, #tpu.memory_space<vmem>>, vector<1x128xf32>
    %12 = vector.broadcast %11 : vector<1x128xf32> to vector<32x128xf32>
    %13 = arith.addf %10, %12 : vector<32x128xf32>
    %cst_11 = arith.constant 0.000000e+00 : f32
    %14 = vector.broadcast %cst_11 : f32 to vector<32x128xf32>
    %15 = arith.maximumf %13, %14 : vector<32x128xf32>
    %16 = arith.truncf %15 : vector<32x128xf32> to vector<32x128xbf16>
    %c0_12 = arith.constant 0 : index
    %c0_13 = arith.constant 0 : index
    %17 = vector.load %arg6[%c0_12, %c0_13] : memref<128x128xbf16, #tpu.memory_space<vmem>>, vector<128x128xbf16>
    %cst_14 = arith.constant dense<0.000000e+00> : vector<32x128xf32>
    %18 = tpu.matmul %16, %17, %cst_14 {dimension_numbers = #tpu.dot_dimension_numbers<[1], [0], [0], [1], [0, 0, 1, 1], [], []>} : vector<32x128xbf16>, vector<128x128xbf16>, vector<32x128xf32> -> vector<32x128xf32>
    %c0_15 = arith.constant 0 : index
    %c0_16 = arith.constant 0 : index
    %19 = vector.load %arg7[%c0_15, %c0_16] : memref<1x128xf32, #tpu.memory_space<vmem>>, vector<1x128xf32>
    %20 = vector.broadcast %19 : vector<1x128xf32> to vector<32x128xf32>
    %21 = arith.addf %18, %20 : vector<32x128xf32>
    %22 = arith.truncf %21 : vector<32x128xf32> to vector<32x128xbf16>
    %c0_17 = arith.constant 0 : index
    %c0_18 = arith.constant 0 : index
    %23 = vector.load %arg8[%c0_17, %c0_18] : memref<32x128xbf16, #tpu.memory_space<vmem>>, vector<32x128xbf16>
    tpu.vector_store %arg8[%c0_17, %c0_18], %22 {strides = array<i32>} : memref<32x128xbf16, #tpu.memory_space<vmem>>, vector<32x128xbf16>,
    return
  }
  func.func @transform_0(%arg0: i32) -> (i32, i32) {
    %c0_i32 = arith.constant 0 : i32
    %c0_i32_0 = arith.constant 0 : i32
    return %arg0, %c0_i32 : i32, i32
  }
  func.func @transform_1(%arg0: i32) -> (i32, i32) {
    %c0_i32 = arith.constant 0 : i32
    %c0_i32_0 = arith.constant 0 : i32
    %c0_i32_1 = arith.constant 0 : i32
    return %c0_i32, %c0_i32_0 : i32, i32
  }
  func.func @transform_2(%arg0: i32) -> (i32, i32) {
    %c0_i32 = arith.constant 0 : i32
    %c0_i32_0 = arith.constant 0 : i32
    %c0_i32_1 = arith.constant 0 : i32
    return %c0_i32, %c0_i32_0 : i32, i32
  }
  func.func @transform_3(%arg0: i32) -> (i32, i32) {
    %c0_i32 = arith.constant 0 : i32
    %c0_i32_0 = arith.constant 0 : i32
    %c0_i32_1 = arith.constant 0 : i32
    return %c0_i32, %c0_i32_0 : i32, i32
  }
  func.func @transform_4(%arg0: i32) -> (i32, i32) {
    %c0_i32 = arith.constant 0 : i32
    %c0_i32_0 = arith.constant 0 : i32
    %c0_i32_1 = arith.constant 0 : i32
    return %c0_i32, %c0_i32_0 : i32, i32
  }
  func.func @transform_5(%arg0: i32) -> (i32, i32) {
    %c0_i32 = arith.constant 0 : i32
    %c0_i32_0 = arith.constant 0 : i32
    %c0_i32_1 = arith.constant 0 : i32
    return %c0_i32, %c0_i32_0 : i32, i32
  }
  func.func @transform_6(%arg0: i32) -> (i32, i32) {
    %c0_i32 = arith.constant 0 : i32
    %c0_i32_0 = arith.constant 0 : i32
    %c0_i32_1 = arith.constant 0 : i32
    return %c0_i32, %c0_i32_0 : i32, i32
  }
  func.func @transform_7(%arg0: i32) -> (i32, i32) {
    %c0_i32 = arith.constant 0 : i32
    %c0_i32_0 = arith.constant 0 : i32
    return %arg0, %c0_i32 : i32, i32
  }
}

</mosaic_0001>

<llo_original>
// kernel: tpu_custom_call.1
$region0: #{tpu_custom_call.1}
  #allocation0 [shape = 'u32[]', space=smem, size = 0x4, offset = 0x4, fixed_abs, tag = 'smem constant byte address 0x4 - core index']
  #allocation1 [shape = 'u32[72,128]{1,0:T(1,128)}', space=vmem, size = 0x9000, scoped, tag = 'internal scratch']
  %s0 = inlined_call_operand.vmem [shape: bf16[32,16], index: 0, kind: input, shape index: {}]
  %s1 = inlined_call_operand.vmem [shape: bf16[16,128], index: 1, kind: input, shape index: {}]
  %s2 = inlined_call_operand.vmem [shape: f32[1,128], index: 2, kind: input, shape index: {}]
  %s3 = inlined_call_operand.hbm [shape: bf16[128,128], index: 3, kind: input, shape index: {}]
  %s4 = inlined_call_operand.vmem [shape: f32[1,128], index: 4, kind: input, shape index: {}]
  %s5 = inlined_call_operand.hbm [shape: bf16[128,128], index: 5, kind: input, shape index: {}]
  %s6 = inlined_call_operand.vmem [shape: f32[1,128], index: 6, kind: input, shape index: {}]
  %s7 = inlined_call_operand.hbm [shape: bf16[32,128], index: 7, kind: output, shape index: {}]
  %s8 = sld [smem:[#allocation0]]
  $region46: #{tpu_custom_call.1} parent=0
    _
  %s10 = ssub.s32 1, %s8
  %s11 = scalar_select 0, %s10, %s8
  $region1: #{tpu_custom_call.1} parent=0
    #allocation2 [shape = 'u8[32768]{0}', space=vmem, size = 0x8000, scoped, tag = 'input window, operand 3, single buffered']
    #allocation3 [shape = 's32[1]{0}', space=sflag, size = 0x4, scoped, tag = 'scoped memory for tpu_custom_call.1']
    #allocation4 [shape = 's32[1]{0}', space=sflag, size = 0x4, scoped, tag = 'scoped memory for tpu_custom_call.1']
    #allocation5 [shape = 'u8[32768]{0}', space=vmem, size = 0x8000, scoped, tag = 'input window, operand 5, single buffered']
    #allocation6 [shape = 's32[1]{0}', space=sflag, size = 0x4, scoped, tag = 'scoped memory for tpu_custom_call.1']
    #allocation7 [shape = 'u8[8192]{0}', space=vmem, size = 0x2000, scoped, tag = 'output window, operand 0, single buffered']
    %12 = vsyncpa [#allocation3], 0
    %13 = vsyncpa [#allocation6], 0
    %14 = vsyncpa [#allocation4], 0
    // Predicated region
    $region2: #{tpu_custom_call.1} parent=1 // pred_check
      _
    $region3: #{tpu_custom_call.1} parent=1 // pred_check_branch
      %16 = sbr.rel (0) target = $region5
    $region4: #{tpu_custom_call.1} parent=1 // pred_region
      _
    $region5: #{tpu_custom_call.1} parent=1 // pred_fallthru
      _
    // Predicated region
    $region6: #{tpu_custom_call.1} parent=1 // pred_check
      _
    $region7: #{tpu_custom_call.1} parent=1 // pred_check_branch
      %18 = sbr.rel (0) target = $region9
    $region8: #{tpu_custom_call.1} parent=1 // pred_region
      _
    $region9: #{tpu_custom_call.1} parent=1 // pred_fallthru
      _
    // Predicated region
    $region10: #{tpu_custom_call.1} parent=1 // pred_check
      _
    $region11: #{tpu_custom_call.1} parent=1 // pred_check_branch
      %20 = sbr.rel (0) target = $region13
    $region12: #{tpu_custom_call.1} parent=1 // pred_region
      _
    $region13: #{tpu_custom_call.1} parent=1 // pred_fallthru
      _
    // Predicated region
    $region14: #{tpu_custom_call.1} parent=1 // pred_check
      _
    $region15: #{tpu_custom_call.1} parent=1 // pred_check_branch
      %22 = sbr.rel (0) target = $region17
    $region16: #{tpu_custom_call.1} parent=1 // pred_region
      %24 = vsyncadd [#allocation3], 0
      %s25 = sshll.u32 %s3, 4
      %s26 = int_to_ptr.hbm [resolvable:$true] %s25
      %s27 = sshll.u32 [#allocation2], 4
      %s28 = int_to_ptr.vmem [resolvable:$true] %s27
      %33 = dma.hbm_to_vmem [thread:$0]  %s26, 1024, %s28, [#allocation3], 64, 64, 4
    $region17: #{tpu_custom_call.1} parent=1 // pred_fallthru
      _
    // Predicated region
    $region18: #{tpu_custom_call.1} parent=1 // pred_check
      _
    $region19: #{tpu_custom_call.1} parent=1 // pred_check_branch
      %35 = sbr.rel (0) target = $region21
    $region20: #{tpu_custom_call.1} parent=1 // pred_region
      _
    $region21: #{tpu_custom_call.1} parent=1 // pred_fallthru
      _
    // Predicated region
    $region22: #{tpu_custom_call.1} parent=1 // pred_check
      _
    $region23: #{tpu_custom_call.1} parent=1 // pred_check_branch
      %37 = sbr.rel (0) target = $region25
    $region24: #{tpu_custom_call.1} parent=1 // pred_region
      %39 = vsyncadd [#allocation6], 0
      %s40 = sshll.u32 %s5, 4
      %s41 = int_to_ptr.hbm [resolvable:$true] %s40
      %s42 = sshll.u32 [#allocation5], 4
      %s43 = int_to_ptr.vmem [resolvable:$true] %s42
      %48 = dma.hbm_to_vmem [thread:$0]  %s41, 1024, %s43, [#allocation6], 64, 64, 4
    $region25: #{tpu_custom_call.1} parent=1 // pred_fallthru
      _
    // Predicated region
    $region26: #{tpu_custom_call.1} parent=1 // pred_check
      _
    $region27: #{tpu_custom_call.1} parent=1 // pred_check_branch
      %50 = sbr.rel (0) target = $region29
    $region28: #{tpu_custom_call.1} parent=1 // pred_region
      _
    $region29: #{tpu_custom_call.1} parent=1 // pred_fallthru
      _
    // Predicated region
    $region30: #{tpu_custom_call.1} parent=1 // pred_check
      _
    $region31: #{tpu_custom_call.1} parent=1 // pred_check_branch
      %52 = sbr.rel (0) target = $region33
    $region32: #{tpu_custom_call.1} parent=1 // pred_region
      %54 = dma.done [#allocation3], 1024
    $region33: #{tpu_custom_call.1} parent=1 // pred_fallthru
      _
    // Predicated region
    $region34: #{tpu_custom_call.1} parent=1 // pred_check
      _
    $region35: #{tpu_custom_call.1} parent=1 // pred_check_branch
      %56 = sbr.rel (0) target = $region37
    $region36: #{tpu_custom_call.1} parent=1 // pred_region
      %58 = dma.done [#allocation6], 1024
    $region37: #{tpu_custom_call.1} parent=1 // pred_fallthru
      _
    %v60 = vld [vmem:[%s0] sm:$0xf]
    %v61 = vld [vmem:[%s0 + $0x4] sm:$0xf]
    %v62 = vld [vmem:[%s0 + $0x8] sm:$0xf]
    %v63 = vld [vmem:[%s0 + $0xc] sm:$0xf]
    %v64 = vld [vmem:[%s1] sm:$0xf]
    %v65 = vld [vmem:[%s1 + $0x4] sm:$0xf]
    %v66 = vld [vmem:[%s2] sm:$0x1]
    %v68 = vperm.slane %v66, 0
    %v74 = vunpack.c.l.b16 %v60
    %v75 = vunpack.c.l.b16 %v61
    %v76 = vunpack.c.l.b16 %v62
    %v77 = vunpack.c.l.b16 %v63
    %v78 = vpack.c.b16 %v75, %v74
    %v79 = vpack.c.b16 %v77, %v76
    %v82 = vunpack.c.l.b16 %v64
    %v83 = vunpack.c.l.b16 %v65
    %v84 = vpack.c.b16 %v83, %v82
    %vm86 = vcmask 130048
    %v88 = vsel %vm86, %v78, 0
    %v91 = vsel %vm86, %v79, 0
    %93 = vmatpush.bf16.msra.mxu0 0
    %94 = vmatpush.bf16.msra.mxu0 0
    %95 = vmatpush.bf16.msra.mxu0 0
    %96 = vmatpush.bf16.msra.mxu0 0
    %97 = vmatpush.bf16.msra.mxu0 0
    %98 = vmatpush.bf16.msra.mxu0 0
    %99 = vmatpush.bf16.msra.mxu0 0
    %100 = vmatpush.bf16.msra.mxu0 %v84
    %101 = vmatmul.bf16.gmra.mxu0 %v88
    %v102 = vpop.f32.mrf.mxu0
    %v103 = vadd.f32 %v68, %v102
    %v104 = vpop.f32.mrf.mxu0
    %v105 = vadd.f32 %v68, %v104
    %106 = vmatmul.bf16.gmra.mxu0 %v91
    %v107 = vpop.f32.mrf.mxu0
    %v108 = vadd.f32 %v68, %v107
    %v109 = vpop.f32.mrf.mxu0
    %v110 = vadd.f32 %v68, %v109
    %111 = vdwg.mxu0
    %v112 = vmax.f32 %v103, 0.0
    %v113 = vmax.f32 %v105, 0.0
    %v114 = vmax.f32 %v108, 0.0
    %v115 = vmax.f32 %v110, 0.0
    %v116 = vpack.c.bf16 %v113, %v112
    %v117 = vpack.c.bf16 %v115, %v114
    %v118 = vld [vmem:[#allocation2] sm:$0xf]
    %v119 = vld [vmem:[#allocation2 + $0x4] sm:$0xf]
    %v120 = vld [vmem:[#allocation2 + $0x8] sm:$0xf]
    %v121 = vld [vmem:[#allocation2 + $0xc] sm:$0xf]
    %v122 = vld [vmem:[#allocation2 + $0x10] sm:$0xf]
    %v123 = vld [vmem:[#allocation2 + $0x14] sm:$0xf]
    %v124 = vld [vmem:[#allocation2 + $0x18] sm:$0xf]
    %v125 = vld [vmem:[#allocation2 + $0x1c] sm:$0xf]
    %v126 = vld [vmem:[#allocation2 + $0x20] sm:$0xf]
    %v127 = vld [vmem:[#allocation2 + $0x24] sm:$0xf]
    %v128 = vld [vmem:[#allocation2 + $0x28] sm:$0xf]
    %v129 = vld [vmem:[#allocation2 + $0x2c] sm:$0xf]
    %v130 = vld [vmem:[#allocation2 + $0x30] sm:$0xf]
    %v131 = vld [vmem:[#allocation2 + $0x34] sm:$0xf]
    %v132 = vld [vmem:[#allocation2 + $0x38] sm:$0xf]
    %v133 = vld [vmem:[#allocation2 + $0x3c] sm:$0xf]
    %v134 = vld [vmem:[%s4] sm:$0x1]
    %v136 = vperm.slane %v134, 0
    %v154 = vunpack.c.l.b16 %v118
    %v155 = vunpack.c.l.b16 %v119
    %v156 = vunpack.c.l.b16 %v120
    %v157 = vunpack.c.l.b16 %v121
    %v158 = vunpack.c.l.b16 %v122
    %v159 = vunpack.c.l.b16 %v123
    %v160 = vunpack.c.l.b16 %v124
    %v161 = vunpack.c.l.b16 %v125
    %v162 = vunpack.c.l.b16 %v126
    %v163 = vunpack.c.l.b16 %v127
    %v164 = vunpack.c.l.b16 %v128
    %v165 = vunpack.c.l.b16 %v129
    %v166 = vunpack.c.l.b16 %v130
    %v167 = vunpack.c.l.b16 %v131
    %v168 = vunpack.c.l.b16 %v132
    %v169 = vunpack.c.l.b16 %v133
    %v170 = vpack.c.b16 %v155, %v154
    %v171 = vpack.c.b16 %v157, %v156
    %v172 = vpack.c.b16 %v159, %v158
    %v173 = vpack.c.b16 %v161, %v160
    %v174 = vpack.c.b16 %v163, %v162
    %v175 = vpack.c.b16 %v165, %v164
    %v176 = vpack.c.b16 %v167, %v166
    %v177 = vpack.c.b16 %v169, %v168
    %186 = vmatpush.bf16.msra.mxu0 %v177
    %187 = vmatpush.bf16.msra.mxu0 %v176
    %188 = vmatpush.bf16.msra.mxu0 %v175
    %189 = vmatpush.bf16.msra.mxu0 %v174
    %190 = vmatpush.bf16.msra.mxu0 %v173
    %191 = vmatpush.bf16.msra.mxu0 %v172
    %192 = vmatpush.bf16.msra.mxu0 %v171
    %193 = vmatpush.bf16.msra.mxu0 %v170
    %194 = vmatmul.bf16.gmra.mxu0 %v116
    %v195 = vpop.f32.mrf.mxu0
    %v196 = vadd.f32 %v136, %v195
    %v197 = vpop.f32.mrf.mxu0
    %v198 = vadd.f32 %v136, %v197
    %199 = vmatmul.bf16.gmra.mxu0 %v117
    %v200 = vpop.f32.mrf.mxu0
    %v201 = vadd.f32 %v136, %v200
    %v202 = vpop.f32.mrf.mxu0
    %v203 = vadd.f32 %v136, %v202
    %204 = vdwg.mxu0
    %v205 = vmax.f32 %v196, 0.0
    %v206 = vmax.f32 %v198, 0.0
    %v207 = vmax.f32 %v201, 0.0
    %v208 = vmax.f32 %v203, 0.0
    %v209 = vpack.c.bf16 %v206, %v205
    %v210 = vpack.c.bf16 %v208, %v207
    %v211 = vld [vmem:[#allocation5] sm:$0xf]
    %v212 = vld [vmem:[#allocation5 + $0x4] sm:$0xf]
    %v213 = vld [vmem:[#allocation5 + $0x8] sm:$0xf]
    %v214 = vld [vmem:[#allocation5 + $0xc] sm:$0xf]
    %v215 = vld [vmem:[#allocation5 + $0x10] sm:$0xf]
    %v216 = vld [vmem:[#allocation5 + $0x14] sm:$0xf]
    %v217 = vld [vmem:[#allocation5 + $0x18] sm:$0xf]
    %v218 = vld [vmem:[#allocation5 + $0x1c] sm:$0xf]
    %v219 = vld [vmem:[#allocation5 + $0x20] sm:$0xf]
    %v220 = vld [vmem:[#allocation5 + $0x24] sm:$0xf]
    %v221 = vld [vmem:[#allocation5 + $0x28] sm:$0xf]
    %v222 = vld [vmem:[#allocation5 + $0x2c] sm:$0xf]
    %v223 = vld [vmem:[#allocation5 + $0x30] sm:$0xf]
    %v224 = vld [vmem:[#allocation5 + $0x34] sm:$0xf]
    %v225 = vld [vmem:[#allocation5 + $0x38] sm:$0xf]
    %v226 = vld [vmem:[#allocation5 + $0x3c] sm:$0xf]
    %v227 = vld [vmem:[%s6] sm:$0x1]
    %v229 = vperm.slane %v227, 0
    %v247 = vunpack.c.l.b16 %v211
    %v248 = vunpack.c.l.b16 %v212
    %v249 = vunpack.c.l.b16 %v213
    %v250 = vunpack.c.l.b16 %v214
    %v251 = vunpack.c.l.b16 %v215
    %v252 = vunpack.c.l.b16 %v216
    %v253 = vunpack.c.l.b16 %v217
    %v254 = vunpack.c.l.b16 %v218
    %v255 = vunpack.c.l.b16 %v219
    %v256 = vunpack.c.l.b16 %v220
    %v257 = vunpack.c.l.b16 %v221
    %v258 = vunpack.c.l.b16 %v222
    %v259 = vunpack.c.l.b16 %v223
    %v260 = vunpack.c.l.b16 %v224
    %v261 = vunpack.c.l.b16 %v225
    %v262 = vunpack.c.l.b16 %v226
    %v263 = vpack.c.b16 %v248, %v247
    %v264 = vpack.c.b16 %v250, %v249
    %v265 = vpack.c.b16 %v252, %v251
    %v266 = vpack.c.b16 %v254, %v253
    %v267 = vpack.c.b16 %v256, %v255
    %v268 = vpack.c.b16 %v258, %v257
    %v269 = vpack.c.b16 %v260, %v259
    %v270 = vpack.c.b16 %v262, %v261
    %279 = vmatpush.bf16.msra.mxu0 %v270
    %280 = vmatpush.bf16.msra.mxu0 %v269
    %281 = vmatpush.bf16.msra.mxu0 %v268
    %282 = vmatpush.bf16.msra.mxu0 %v267
    %283 = vmatpush.bf16.msra.mxu0 %v266
    %284 = vmatpush.bf16.msra.mxu0 %v265
    %285 = vmatpush.bf16.msra.mxu0 %v264
    %286 = vmatpush.bf16.msra.mxu0 %v263
    %287 = vmatmul.bf16.gmra.mxu0 %v209
    %v288 = vpop.f32.mrf.mxu0
    %v289 = vadd.f32 %v229, %v288
    %v290 = vpop.f32.mrf.mxu0
    %v291 = vadd.f32 %v229, %v290
    %292 = vmatmul.bf16.gmra.mxu0 %v210
    %v293 = vpop.f32.mrf.mxu0
    %v294 = vadd.f32 %v229, %v293
    %v295 = vpop.f32.mrf.mxu0
    %v296 = vadd.f32 %v229, %v295
    %297 = vdwg.mxu0
    %v298 = vpack.c.bf16 %v289, %v289
    %v299 = vpack.c.bf16 %v291, %v291
    %v300 = vpack.c.bf16 %v294, %v294
    %v301 = vpack.c.bf16 %v296, %v296
    %302 = vst [vmem:[#allocation7] sm:$0xf] %v298
    %303 = vst [vmem:[#allocation7 + $0x4] sm:$0xf] %v299
    %304 = vst [vmem:[#allocation7 + $0x8] sm:$0xf] %v300
    %305 = vst [vmem:[#allocation7 + $0xc] sm:$0xf] %v301
    // Predicated region
    $region38: #{tpu_custom_call.1} parent=1 // pred_check
      _
    $region39: #{tpu_custom_call.1} parent=1 // pred_check_branch
      %307 = sbr.rel (0) target = $region41
    $region40: #{tpu_custom_call.1} parent=1 // pred_region
      %309 = vsyncadd [#allocation4], 0
      %s310 = sshll.u32 [#allocation7], 4
      %s311 = int_to_ptr.vmem [resolvable:$true] %s310
      %s312 = sshll.u32 %s7, 4
      %s313 = int_to_ptr.hbm [resolvable:$true] %s312
      %318 = dma.vmem_to_hbm [thread:$0]  %s311, 256, %s313, [#allocation4], 64, 64, 4
    $region41: #{tpu_custom_call.1} parent=1 // pred_fallthru
      _
    // Predicated region
    $region42: #{tpu_custom_call.1} parent=1 // pred_check
      _
    $region43: #{tpu_custom_call.1} parent=1 // pred_check_branch
      %320 = sbr.rel (0) target = $region45
    $region44: #{tpu_custom_call.1} parent=1 // pred_region
      %322 = dma.done [#allocation4], 256
    $region45: #{tpu_custom_call.1} parent=1 // pred_fallthru
      _
    %323 = vsyncpa [#allocation3], 1
    %324 = vsyncpa [#allocation6], 1
    %325 = vsyncpa [#allocation4], 1

</llo_original>
